<compile_context>
chip_gen: v7x
topology: tpu7x:2x2x1
jax: 0.10.0
libtpu: 0.0.40
codegen_flags: <defaults>
</compile_context>

<pallas_src>
import functools
import re

import jax
import jax.numpy as jnp
from jax.experimental import pallas as pl
from jax.experimental.pallas import tpu as pltpu

HIDDEN = 10
OUTPUT = 6
NUM_LAYERS = 2

LANE = 128              # TPU lane width
PAD_H = 16              # hidden rows padded to a sublane multiple (f32: 8 -> 16)
DEFAULT_TILE_N = 2048   # lanes per grid step (amortizes ~0.35 us step overhead)
MIN_TILES = 4           # prefer >= 4 grid steps so DMA of i+1 overlaps compute of i

# Column layout of the packed [PAD_H, LANE] parameter slab.
_C_W1 = 0                      # w1: [:HIDDEN, 0:1]
_C_B1 = 1                      # b1: [:HIDDEN, 1:2]
_C_W2 = 2                      # w2: [:HIDDEN, 2:2+HIDDEN] (padded slice [16,16])
_C_B2 = _C_W2 + PAD_H          # 18
_C_W3 = _C_B2 + 1              # 19
_C_B3 = _C_W3 + PAD_H          # 35


# ----------------------------------------------------------------------------
# Pallas kernel: fused 3-layer MLP forward in feature-major (transposed) layout
# ----------------------------------------------------------------------------
def _mlp_kernel(t_ref, p_ref, o_ref, *, apply_sigmoid: bool, act_dtype):
    # Per grid step:
    #   t_ref : [1, TN] f32      p_ref : [16, 128] f32 (constant, VMEM-resident)
    #   o_ref : [OUTPUT, TN]
    P = p_ref[...]                                              # [16, 128]
    w1 = P[:, _C_W1:_C_W1 + 1]                                  # [16, 1]
    b1 = P[:, _C_B1:_C_B1 + 1]                                  # [16, 1]
    w2 = P[:, _C_W2:_C_W2 + PAD_H].astype(act_dtype)            # [16, 16] (zero-padded)
    b2 = P[:, _C_B2:_C_B2 + 1]                                  # [16, 1]
    w3 = P[:OUTPUT, _C_W3:_C_W3 + PAD_H].astype(act_dtype)      # [6, 16]  (zero-padded)
    b3 = P[:OUTPUT, _C_B3:_C_B3 + 1]                            # [6, 1]

    t_row = t_ref[...]                                          # [1, TN]

    # Layer 1: K = 1 "matmul" == outer product -> pure VPU broadcast FMA.
    # Padded rows have w1 = b1 = 0, so they stay exactly tanh(0) = 0.
    h = jnp.tanh((w1 * t_row + b1).astype(act_dtype))           # [16, TN]

    # Layer 2: [16,16] @ [16,TN] on the MXU, f32 accumulation, bias in f32.
    z = jnp.dot(w2, h, preferred_element_type=jnp.float32) + b2
    h = jnp.tanh(z.astype(act_dtype))                           # [16, TN]

    # Output layer (no activation inside the nn.Sequential).
    out = jnp.dot(w3, h, preferred_element_type=jnp.float32) + b3   # [6, TN] f32

    if apply_sigmoid:   # fused epilogue for get_parameters (EUP op on hot vregs)
        out = jax.nn.sigmoid(out.astype(act_dtype))

    o_ref[...] = out.astype(o_ref.dtype)                        # lane-dense store


# ----------------------------------------------------------------------------
# Helpers
# ----------------------------------------------------------------------------
def _bf16_math_supported():
    """bf16 VPU/EUP exists on TPU v6e / v7x; NOT on v5e and earlier."""
    try:
        kind = jax.devices()[0].device_kind.lower()
    except Exception:
        return False
    m = re.search(r"v(\d+)", kind)
    return bool(m) and int(m.group(1)) >= 6


def _pack_params(params):
    """Packs (w1,b1,w2,b2,w3,b3) into one zero-padded [16, 128] f32 slab."""
    w1, b1, w2, b2, w3, b3 = (jnp.asarray(a, jnp.float32) for a in params)
    P = jnp.zeros((PAD_H, LANE), jnp.float32)
    P = P.at[:HIDDEN, _C_W1:_C_W1 + 1].set(w1)
    P = P.at[:HIDDEN, _C_B1:_C_B1 + 1].set(b1)
    P = P.at[:HIDDEN, _C_W2:_C_W2 + HIDDEN].set(w2)
    P = P.at[:HIDDEN, _C_B2:_C_B2 + 1].set(b2)
    P = P.at[:OUTPUT, _C_W3:_C_W3 + HIDDEN].set(w3)
    P = P.at[:OUTPUT, _C_B3:_C_B3 + 1].set(b3)
    return P


# ----------------------------------------------------------------------------
# Wrapper: pad batch onto the lane axis, tile it with a 1-D parallel grid
# ----------------------------------------------------------------------------
def _run_mlp(t, params, *, tile_n=DEFAULT_TILE_N, apply_sigmoid=False,
             use_bf16=None, out_dtype=jnp.float32, core_parallel=False):
    """Runs the fused MLP.  Returns the transposed, lane-padded output
    [OUTPUT, n_pad] (no slice / no transpose — callers slice lazily)."""
    if use_bf16 is None:
        use_bf16 = _bf16_math_supported()
    act_dtype = jnp.bfloat16 if use_bf16 else jnp.float32

    n = t.shape[0]
    n_lane = pl.cdiv(n, LANE) * LANE
    # Prefer >= MIN_TILES grid steps (so the pipeline has slack), never below
    # one lane group, never above the requested tile_n; always a 128 multiple.
    tn = max(LANE, min(tile_n, (n_lane // MIN_TILES) // LANE * LANE))
    n_pad = pl.cdiv(n_lane, tn) * tn
    num_tiles = n_pad // tn

    t_row = jnp.pad(t.reshape(1, -1).astype(jnp.float32),
                    ((0, 0), (0, n_pad - n)))                   # [1, n_pad]
    packed = _pack_params(params)                               # [16, 128]

    out_bytes = OUTPUT * jnp.dtype(out_dtype).itemsize
    cost = pl.CostEstimate(
        flops=(2 * PAD_H                       # layer-1 FMA
               + 2 * PAD_H * PAD_H + PAD_H     # layer-2 matmul + bias
               + 2 * OUTPUT * PAD_H + OUTPUT   # layer-3 matmul + bias
               ) * n_pad,
        transcendentals=(2 * PAD_H + (OUTPUT if apply_sigmoid else 0)) * n_pad,
        bytes_accessed=(4 + out_bytes) * n_pad + PAD_H * LANE * 4,
    )

    # "parallel" is fine on v5e/v6e (1 TC); CORE_PARALLEL is the lever that
    # actually splits the batch axis across v7x's two TensorCores.
    batch_sem = pltpu.CORE_PARALLEL if core_parallel else pltpu.PARALLEL

    out_t = pl.pallas_call(
        functools.partial(_mlp_kernel, apply_sigmoid=apply_sigmoid,
                          act_dtype=act_dtype),
        out_shape=jax.ShapeDtypeStruct((OUTPUT, n_pad), out_dtype),
        grid=(num_tiles,),
        in_specs=[
            pl.BlockSpec((1, tn), lambda i: (0, i)),        # t, tiled over batch
            pl.BlockSpec((PAD_H, LANE), lambda i: (0, 0)),  # packed params, resident
        ],
        out_specs=pl.BlockSpec((OUTPUT, tn), lambda i: (0, i)),
        compiler_params=pltpu.CompilerParams(dimension_semantics=(batch_sem,)),
        cost_estimate=cost,
    )(t_row, packed)
    return out_t


def parameter_net_forward_t(t, params, **kw):
    """Preferred fused entry point: raw MLP output in the kernel's lane-dense
    [OUTPUT, N] layout (avoids materializing the [N, OUTPUT] transpose)."""
    n = t.shape[0]
    return _run_mlp(t, params, **kw)[:, :n]


def parameter_net_forward(t, params, **kw):
    """PyTorch-parity ParameterNet.forward: [N, 1] float -> [N, OUTPUT].
    The transpose here is an extra HBM copy; prefer parameter_net_forward_t /
    get_parameters when the consumer can take [OUTPUT, N] directly."""
    return parameter_net_forward_t(t, params, **kw).T


def get_parameters(t, params, **kw):
    """ParameterNet.get_parameters: sigmoid fused into the kernel epilogue; the
    six parameter vectors are contiguous row slices of the [OUTPUT, N] output."""
    # TODO(synk): on v5e pass out_dtype=jnp.bfloat16 if downstream tolerance
    # allows — halves the output HBM writeback (the dominant traffic there).
    n = t.shape[0]
    sig_t = _run_mlp(t, params, apply_sigmoid=True, **kw)       # [OUTPUT, n_pad]
    return tuple(sig_t[i, :n] for i in range(OUTPUT))


# ----------------------------------------------------------------------------
# Deterministic parameter init (Xavier normal, tanh gain = 5/3; bias 0.01).
# Weights kept in PyTorch-native [out, in] layout; biases as [out, 1].
# ----------------------------------------------------------------------------
def init_params(key, hidden_neurons=HIDDEN, output_size=OUTPUT, num_layers=NUM_LAYERS):
    gain = 5.0 / 3.0  # nn.init.calculate_gain('tanh')

    def xavier_normal(k, fan_out, fan_in):
        std = gain * (2.0 / (fan_in + fan_out)) ** 0.5
        return std * jax.random.normal(k, (fan_out, fan_in), dtype=jnp.float32)

    dims = [1] + [hidden_neurons] * num_layers + [output_size]
    keys = jax.random.split(key, len(dims) - 1)
    params = []
    for k, fi, fo in zip(keys, dims[:-1], dims[1:]):
        params.append(xavier_normal(k, fo, fi))                    # [out, in]
        params.append(jnp.full((fo, 1), 0.01, dtype=jnp.float32))  # [out, 1]
    return tuple(params)


# ----------------------------------------------------------------------------
# Reference (pure JAX, batch-major) for verification
# ----------------------------------------------------------------------------
def reference_forward(t, params):
    w1, b1, w2, b2, w3, b3 = params
    h = jnp.tanh(t @ w1.T + b1.T)
    h = jnp.tanh(h @ w2.T + b2.T)
    return h @ w3.T + b3.T


if __name__ == "__main__":
    key = jax.random.PRNGKey(0)
    k_param, k_small, k_big = jax.random.split(key, 3)

    params = init_params(k_param)

    # ---- exact f32 path (bit-for-bit comparable to the reference) ----------
    n_small = 8
    t_small = jax.random.uniform(k_small, (n_small, 1), dtype=jnp.float32)
    out_small = jax.block_until_ready(
        parameter_net_forward(t_small, params, use_bf16=False))
    ref_small = reference_forward(t_small, params)
    assert out_small.shape == (n_small, OUTPUT)
    assert jnp.allclose(out_small, ref_small, atol=1e-5, rtol=1e-5), "small-batch mismatch"

    # Non-multiple batch: exercises lane padding + multi-tile pipelined grid.
    n_big = 700
    t_big = jax.random.uniform(k_big, (n_big, 1), dtype=jnp.float32)
    out_big = jax.block_until_ready(
        parameter_net_forward(t_big, params, use_bf16=False))
    ref_big = reference_forward(t_big, params)
    assert out_big.shape == (n_big, OUTPUT)
    assert jnp.allclose(out_big, ref_big, atol=1e-5, rtol=1e-5), "big-batch mismatch"

    # Fused-sigmoid get_parameters path (row slices of the [OUT, N] output).
    betas = get_parameters(t_small, params, use_bf16=False)
    jax.block_until_ready(betas[0])
    ref_sig = jax.nn.sigmoid(ref_small)
    assert len(betas) == OUTPUT
    for i, b in enumerate(betas):
        assert b.shape == (n_small,)
        assert jnp.allclose(b, ref_sig[:, i], atol=1e-5, rtol=1e-5), "sigmoid mismatch"

    # ---- auto-detected activation dtype (bf16 tanh/sigmoid on v6e/v7x) -----
    bf16 = _bf16_math_supported()
    tol = 3e-2 if bf16 else 1e-5
    out_auto = jax.block_until_ready(parameter_net_forward(t_big, params))
    assert out_auto.shape == (n_big, OUTPUT)
    assert jnp.allclose(out_auto, ref_big, atol=tol, rtol=tol), "auto-dtype mismatch"

    print("KERNEL_OK")
</pallas_src>

<mosaic_0001>
module attributes {stable_mosaic.version = 11 : i64} {
  func.func @_mlp_kernel(%arg0: i32, %arg1: memref<1x128xf32, #tpu.memory_space<vmem>>, %arg2: memref<16x128xf32, #tpu.memory_space<vmem>>, %arg3: memref<6x128xf32, #tpu.memory_space<vmem>>) attributes {dimension_semantics = [#tpu.dimension_semantics<parallel>], iteration_bounds = array<i64: 1>, scalar_prefetch = 0 : i64, scratch_operands = 0 : i64, tpu.core_type = #tpu.core_type<tc>, window_params = [{transform_indices = @transform_0, window_bounds = array<i64: 1, 128>}, {pipeline_mode = #tpu.pipeline_mode<synchronous>, transform_indices = @transform_1, window_bounds = array<i64: 16, 128>}, {transform_indices = @transform_2, window_bounds = array<i64: 6, 128>}]} {
    %c0 = arith.constant 0 : index
    %c0_0 = arith.constant 0 : index
    %0 = vector.load %arg2[%c0, %c0_0] : memref<16x128xf32, #tpu.memory_space<vmem>>, vector<16x128xf32>
    %1 = vector.extract_strided_slice %0 {offsets = [0, 0], sizes = [16, 1], strides = [1, 1]} : vector<16x128xf32> to vector<16x1xf32>
    %2 = vector.extract_strided_slice %0 {offsets = [0, 1], sizes = [16, 1], strides = [1, 1]} : vector<16x128xf32> to vector<16x1xf32>
    %3 = vector.extract_strided_slice %0 {offsets = [0, 2], sizes = [16, 16], strides = [1, 1]} : vector<16x128xf32> to vector<16x16xf32>
    %4 = vector.extract_strided_slice %0 {offsets = [0, 18], sizes = [16, 1], strides = [1, 1]} : vector<16x128xf32> to vector<16x1xf32>
    %5 = vector.extract_strided_slice %0 {offsets = [0, 19], sizes = [6, 16], strides = [1, 1]} : vector<16x128xf32> to vector<6x16xf32>
    %6 = vector.extract_strided_slice %0 {offsets = [0, 35], sizes = [6, 1], strides = [1, 1]} : vector<16x128xf32> to vector<6x1xf32>
    %c0_1 = arith.constant 0 : index
    %c0_2 = arith.constant 0 : index
    %7 = vector.load %arg1[%c0_1, %c0_2] : memref<1x128xf32, #tpu.memory_space<vmem>>, vector<1x128xf32>
    %8 = vector.broadcast %1 : vector<16x1xf32> to vector<16x128xf32>
    %9 = vector.broadcast %7 : vector<1x128xf32> to vector<16x128xf32>
    %10 = arith.mulf %8, %9 : vector<16x128xf32>
    %11 = vector.broadcast %2 : vector<16x1xf32> to vector<16x128xf32>
    %12 = arith.addf %10, %11 : vector<16x128xf32>
    %13 = math.tanh %12 : vector<16x128xf32>
    %cst = arith.constant dense<0.000000e+00> : vector<16x128xf32>
    %14 = tpu.matmul %3, %13, %cst {dimension_numbers = #tpu.dot_dimension_numbers<[1], [0], [0], [1], [0, 0, 1, 1], [], []>} : vector<16x16xf32>, vector<16x128xf32>, vector<16x128xf32> -> vector<16x128xf32>
    %15 = vector.broadcast %4 : vector<16x1xf32> to vector<16x128xf32>
    %16 = arith.addf %14, %15 : vector<16x128xf32>
    %17 = math.tanh %16 : vector<16x128xf32>
    %cst_3 = arith.constant dense<0.000000e+00> : vector<6x128xf32>
    %18 = tpu.matmul %5, %17, %cst_3 {dimension_numbers = #tpu.dot_dimension_numbers<[1], [0], [0], [1], [0, 0, 1, 1], [], []>} : vector<6x16xf32>, vector<16x128xf32>, vector<6x128xf32> -> vector<6x128xf32>
    %19 = vector.broadcast %6 : vector<6x1xf32> to vector<6x128xf32>
    %20 = arith.addf %18, %19 : vector<6x128xf32>
    %c0_4 = arith.constant 0 : index
    %c0_5 = arith.constant 0 : index
    %21 = vector.load %arg3[%c0_4, %c0_5] : memref<6x128xf32, #tpu.memory_space<vmem>>, vector<6x128xf32>
    tpu.vector_store %arg3[%c0_4, %c0_5], %20 {strides = array<i32>} : memref<6x128xf32, #tpu.memory_space<vmem>>, vector<6x128xf32>,
    return
  }
  func.func @transform_0(%arg0: i32) -> (i32, i32) {
    %c0_i32 = arith.constant 0 : i32
    %c0_i32_0 = arith.constant 0 : i32
    return %c0_i32, %arg0 : i32, i32
  }
  func.func @transform_1(%arg0: i32) -> (i32, i32) {
    %c0_i32 = arith.constant 0 : i32
    %c0_i32_0 = arith.constant 0 : i32
    %c0_i32_1 = arith.constant 0 : i32
    return %c0_i32, %c0_i32_0 : i32, i32
  }
  func.func @transform_2(%arg0: i32) -> (i32, i32) {
    %c0_i32 = arith.constant 0 : i32
    %c0_i32_0 = arith.constant 0 : i32
    return %c0_i32, %arg0 : i32, i32
  }
}

</mosaic_0001>

<llo_original>
// kernel: tpu_custom_call.1
$region0: #{tpu_custom_call.1}
  #allocation0 [shape = 'u32[]', space=smem, size = 0x4, offset = 0x4, fixed_abs, tag = 'smem constant byte address 0x4 - core index']
  #allocation1 [shape = 'u32[144,128]{1,0:T(1,128)}', space=vmem, size = 0x12000, scoped, tag = 'internal scratch']
  %s0 = inlined_call_operand.hbm [shape: f32[1,128], index: 0, kind: input, shape index: {}]
  %s1 = inlined_call_operand.hbm [shape: f32[16,128], index: 1, kind: input, shape index: {}]
  %s2 = inlined_call_operand.hbm [shape: f32[6,128], index: 2, kind: output, shape index: {}]
  %s3 = sld [smem:[#allocation0]]
  $region26: #{tpu_custom_call.1} parent=0
    _
  %s5 = ssub.s32 1, %s3
  %s6 = scalar_select 0, %s5, %s3
  $region1: #{tpu_custom_call.1} parent=0
    #allocation2 [shape = 'u8[512]{0}', space=vmem, size = 0x400, scoped, tag = 'input window, operand 0, single buffered']
    #allocation3 [shape = 's32[1]{0}', space=sflag, size = 0x4, scoped, tag = 'scoped memory for tpu_custom_call.1']
    #allocation4 [shape = 's32[1]{0}', space=sflag, size = 0x4, scoped, tag = 'scoped memory for tpu_custom_call.1']
    #allocation5 [shape = 'u8[8192]{0}', space=vmem, size = 0x2000, scoped, tag = 'input window, operand 1, single buffered']
    #allocation6 [shape = 's32[1]{0}', space=sflag, size = 0x4, scoped, tag = 'scoped memory for tpu_custom_call.1']
    #allocation7 [shape = 'u8[4096]{0}', space=vmem, size = 0x1000, scoped, tag = 'output window, operand 0, single buffered']
    %7 = vsyncpa [#allocation3], 0
    %8 = vsyncpa [#allocation6], 0
    %9 = vsyncpa [#allocation4], 0
    // Predicated region
    $region2: #{tpu_custom_call.1} parent=1 // pred_check
      _
    $region3: #{tpu_custom_call.1} parent=1 // pred_check_branch
      %11 = sbr.rel (0) target = $region5
    $region4: #{tpu_custom_call.1} parent=1 // pred_region
      %s13 = ssub.s32 16, 16
      %14 = vsyncadd [#allocation3], %s13
      %s16 = sshll.u32 [#allocation2], 4
      %s17 = int_to_ptr.vmem [resolvable:$true] %s16
      %19 = dma.hbm_to_vmem [thread:$0]  %s0, 16, %s17, [#allocation3]
    $region5: #{tpu_custom_call.1} parent=1 // pred_fallthru
      _
    // Predicated region
    $region6: #{tpu_custom_call.1} parent=1 // pred_check
      _
    $region7: #{tpu_custom_call.1} parent=1 // pred_check_branch
      %21 = sbr.rel (0) target = $region9
    $region8: #{tpu_custom_call.1} parent=1 // pred_region
      %s23 = ssub.s32 256, 256
      %24 = vsyncadd [#allocation6], %s23
      %s25 = sshll.u32 [#allocation5], 4
      %s26 = int_to_ptr.vmem [resolvable:$true] %s25
      %31 = dma.hbm_to_vmem [thread:$0]  %s1, 256, %s26, [#allocation6], 128, 128, 8
    $region9: #{tpu_custom_call.1} parent=1 // pred_fallthru
      _
    // Predicated region
    $region10: #{tpu_custom_call.1} parent=1 // pred_check
      _
    $region11: #{tpu_custom_call.1} parent=1 // pred_check_branch
      %33 = sbr.rel (0) target = $region13
    $region12: #{tpu_custom_call.1} parent=1 // pred_region
      %34 = dma.done [#allocation3], 16
    $region13: #{tpu_custom_call.1} parent=1 // pred_fallthru
      _
    // Predicated region
    $region14: #{tpu_custom_call.1} parent=1 // pred_check
      _
    $region15: #{tpu_custom_call.1} parent=1 // pred_check_branch
      %36 = sbr.rel (0) target = $region17
    $region16: #{tpu_custom_call.1} parent=1 // pred_region
      %37 = dma.done [#allocation6], 256
    $region17: #{tpu_custom_call.1} parent=1 // pred_fallthru
      _
    %v38 = vld [vmem:[#allocation5] sm:$0xff]
    %v39 = vld [vmem:[#allocation5 + $0x8] sm:$0xff]
    %v40 = vld [vmem:[#allocation2] sm:$0x1]
    %42 = vset.pattern.permute.xlu0 0
    %43 = vperm.xlu0 %42, %v38
    %v44 = vpop.permute.xlu0 %43
    %47 = vset.pattern.permute.xlu0 0
    %48 = vperm.xlu0 %47, %v39
    %v49 = vpop.permute.xlu0 %48
    %v52 = vlaneseq
    %v53 = vshrl.u32 %v52, 7
    %v54 = vsub.s32 0, %v53
    %v55 = vrot.slane %v40, %v54
    %v57 = vmul.f32 %v44, %v55
    %v58 = vmul.f32 %v49, %v55
    %59 = vset.pattern.permute.xlu0 1
    %60 = vperm.xlu0 %59, %v38
    %v61 = vpop.permute.xlu0 %60
    %63 = vset.pattern.permute.xlu0 1
    %64 = vperm.xlu0 %63, %v39
    %v65 = vpop.permute.xlu0 %64
    %v67 = vadd.f32 %v57, %v61
    %v68 = vadd.f32 %v58, %v65
    %v69 = vtanh.pop %v67
    %v70 = vtanh.pop %v68
    %71 = vset.pattern.permute.xlu0 18
    %72 = vperm.xlu0 %71, %v38
    %v73 = vpop.permute.xlu0 %72
    %75 = vset.pattern.permute.xlu0 18
    %76 = vperm.xlu0 %75, %v39
    %v77 = vpop.permute.xlu0 %76
    %79 = vrot.lane.b32.xlu0 %v38, 126
    %v80 = vpop.permute.xlu0 %79
    %81 = vrot.lane.b32.xlu0 %v39, 126
    %v82 = vpop.permute.xlu0 %81
    %vm83 = vcmask 130048
    %v84 = vsel %vm83, %v80, 0
    %v86 = vsel %vm83, %v82, 0
    %88 = vmatprep.subr.mxu0 0.0
    %89 = vmatpush1.msra.mxu0 %v69
    %90 = vmatprep.subr.mxu0 0.0
    %91 = vmatpush1.msra.mxu0 %v70
    %92 = vmatprep.subr.mxu0 0.0
    %93 = vmatpush1.msra.mxu0 0.0
    %94 = vmatprep.subr.mxu0 0.0
    %95 = vmatpush1.msra.mxu0 0.0
    %96 = vmatprep.subr.mxu0 0.0
    %97 = vmatpush1.msra.mxu0 0.0
    %98 = vmatprep.subr.mxu0 0.0
    %99 = vmatpush1.msra.mxu0 0.0
    %100 = vmatprep.subr.mxu0 0.0
    %101 = vmatpush1.msra.mxu0 0.0
    %102 = vmatprep.subr.mxu0 0.0
    %103 = vmatpush1.msra.mxu0 0.0
    %104 = vmatprep.subr.mxu0 0.0
    %105 = vmatpush1.msra.mxu0 0.0
    %106 = vmatprep.subr.mxu0 0.0
    %107 = vmatpush1.msra.mxu0 0.0
    %108 = vmatprep.subr.mxu0 0.0
    %109 = vmatpush1.msra.mxu0 0.0
    %110 = vmatprep.subr.mxu0 0.0
    %111 = vmatpush1.msra.mxu0 0.0
    %112 = vmatprep.subr.mxu0 0.0
    %113 = vmatpush1.msra.mxu0 0.0
    %114 = vmatprep.subr.mxu0 0.0
    %115 = vmatpush1.msra.mxu0 0.0
    %116 = vmatprep.subr.mxu0 0.0
    %117 = vmatpush1.msra.mxu0 0.0
    %118 = vmatprep.subr.mxu0 0.0
    %119 = vmatpush1.msra.mxu0 0.0
    %120 = vmatprep.subr.mxu0 0.0
    %121 = vmatpush1.msra.mxu0 0.0
    %122 = vmatprep.subr.mxu0 0.0
    %123 = vmatpush1.msra.mxu0 0.0
    %124 = vmatprep.subr.mxu0 0.0
    %125 = vmatpush1.msra.mxu0 0.0
    %126 = vmatprep.subr.mxu0 0.0
    %127 = vmatpush1.msra.mxu0 0.0
    %128 = vmatprep.subr.mxu0 0.0
    %129 = vmatpush1.msra.mxu0 0.0
    %130 = vmatprep.subr.mxu0 0.0
    %131 = vmatpush1.msra.mxu0 0.0
    %132 = vmatprep.subr.mxu0 0.0
    %133 = vmatpush1.msra.mxu0 0.0
    %134 = vmatprep.subr.mxu0 0.0
    %135 = vmatpush1.msra.mxu0 0.0
    %136 = vmatprep.subr.mxu0 0.0
    %137 = vmatpush1.msra.mxu0 0.0
    %138 = vmatprep.subr.mxu0 0.0
    %139 = vmatpush1.msra.mxu0 0.0
    %140 = vmatprep.subr.mxu0 0.0
    %141 = vmatpush1.msra.mxu0 0.0
    %142 = vmatprep.subr.mxu0 0.0
    %143 = vmatpush1.msra.mxu0 0.0
    %144 = vmatprep.subr.mxu0 0.0
    %145 = vmatpush1.msra.mxu0 0.0
    %146 = vmatprep.subr.mxu0 0.0
    %147 = vmatpush1.msra.mxu0 0.0
    %148 = vmatprep.subr.mxu0 0.0
    %149 = vmatpush1.msra.mxu0 0.0
    %150 = vmatprep.subr.mxu0 0.0
    %151 = vmatpush1.msra.mxu0 0.0
    %152 = vmatprep.mubr.f32.mxu0 0.0
    %153 = vmatmul.mubr.f32.gmra.mrb[0].mxu0 %v84
    %v154 = vpop.f32.mrb[0].mxu0
    %v155 = vadd.f32 %v73, %v154
    %v156 = vpop.f32.mrb[0].mxu0
    %157 = vmatprep.mubr.f32.mxu0 0.0
    %158 = vmatmul.mubr.f32.gmra.mrb[0].mxu0 %v86
    %v159 = vpop.f32.mrb[0].mxu0
    %v160 = vadd.f32 %v77, %v159
    %v161 = vpop.f32.mrb[0].mxu0
    %162 = vdwg.mxu0
    %v163 = vtanh.pop %v155
    %v164 = vtanh.pop %v160
    %165 = vset.pattern.permute.xlu0 35
    %166 = vperm.xlu0 %165, %v38
    %v167 = vpop.permute.xlu0 %166
    %169 = vrot.lane.b32.xlu0 %v38, 109
    %v170 = vpop.permute.xlu0 %169
    %v171 = vsel %vm83, %v170, 0
    %173 = vmatprep.subr.mxu0 0.0
    %174 = vmatpush1.msra.mxu0 %v163
    %175 = vmatprep.subr.mxu0 0.0
    %176 = vmatpush1.msra.mxu0 %v164
    %177 = vmatprep.subr.mxu0 0.0
    %178 = vmatpush1.msra.mxu0 0.0
    %179 = vmatprep.subr.mxu0 0.0
    %180 = vmatpush1.msra.mxu0 0.0
    %181 = vmatprep.subr.mxu0 0.0
    %182 = vmatpush1.msra.mxu0 0.0
    %183 = vmatprep.subr.mxu0 0.0
    %184 = vmatpush1.msra.mxu0 0.0
    %185 = vmatprep.subr.mxu0 0.0
    %186 = vmatpush1.msra.mxu0 0.0
    %187 = vmatprep.subr.mxu0 0.0
    %188 = vmatpush1.msra.mxu0 0.0
    %189 = vmatprep.subr.mxu0 0.0
    %190 = vmatpush1.msra.mxu0 0.0
    %191 = vmatprep.subr.mxu0 0.0
    %192 = vmatpush1.msra.mxu0 0.0
    %193 = vmatprep.subr.mxu0 0.0
    %194 = vmatpush1.msra.mxu0 0.0
    %195 = vmatprep.subr.mxu0 0.0
    %196 = vmatpush1.msra.mxu0 0.0
    %197 = vmatprep.subr.mxu0 0.0
    %198 = vmatpush1.msra.mxu0 0.0
    %199 = vmatprep.subr.mxu0 0.0
    %200 = vmatpush1.msra.mxu0 0.0
    %201 = vmatprep.subr.mxu0 0.0
    %202 = vmatpush1.msra.mxu0 0.0
    %203 = vmatprep.subr.mxu0 0.0
    %204 = vmatpush1.msra.mxu0 0.0
    %205 = vmatprep.subr.mxu0 0.0
    %206 = vmatpush1.msra.mxu0 0.0
    %207 = vmatprep.subr.mxu0 0.0
    %208 = vmatpush1.msra.mxu0 0.0
    %209 = vmatprep.subr.mxu0 0.0
    %210 = vmatpush1.msra.mxu0 0.0
    %211 = vmatprep.subr.mxu0 0.0
    %212 = vmatpush1.msra.mxu0 0.0
    %213 = vmatprep.subr.mxu0 0.0
    %214 = vmatpush1.msra.mxu0 0.0
    %215 = vmatprep.subr.mxu0 0.0
    %216 = vmatpush1.msra.mxu0 0.0
    %217 = vmatprep.subr.mxu0 0.0
    %218 = vmatpush1.msra.mxu0 0.0
    %219 = vmatprep.subr.mxu0 0.0
    %220 = vmatpush1.msra.mxu0 0.0
    %221 = vmatprep.subr.mxu0 0.0
    %222 = vmatpush1.msra.mxu0 0.0
    %223 = vmatprep.subr.mxu0 0.0
    %224 = vmatpush1.msra.mxu0 0.0
    %225 = vmatprep.subr.mxu0 0.0
    %226 = vmatpush1.msra.mxu0 0.0
    %227 = vmatprep.subr.mxu0 0.0
    %228 = vmatpush1.msra.mxu0 0.0
    %229 = vmatprep.subr.mxu0 0.0
    %230 = vmatpush1.msra.mxu0 0.0
    %231 = vmatprep.subr.mxu0 0.0
    %232 = vmatpush1.msra.mxu0 0.0
    %233 = vmatprep.subr.mxu0 0.0
    %234 = vmatpush1.msra.mxu0 0.0
    %235 = vmatprep.subr.mxu0 0.0
    %236 = vmatpush1.msra.mxu0 0.0
    %237 = vmatprep.mubr.f32.mxu0 0.0
    %238 = vmatmul.mubr.f32.gmra.mrb[0].mxu0 %v171
    %v239 = vpop.f32.mrb[0].mxu0
    %v240 = vadd.f32 %v167, %v239
    %v241 = vpop.f32.mrb[0].mxu0
    %242 = vdwg.mxu0
    %243 = vst [vmem:[#allocation7] sm:$0x3f] %v240
    // Predicated region
    $region18: #{tpu_custom_call.1} parent=1 // pred_check
      _
    $region19: #{tpu_custom_call.1} parent=1 // pred_check_branch
      %245 = sbr.rel (0) target = $region21
    $region20: #{tpu_custom_call.1} parent=1 // pred_region
      %s247 = ssub.s32 128, 128
      %248 = vsyncadd [#allocation4], %s247
      %s250 = sshll.u32 [#allocation7], 4
      %s251 = int_to_ptr.vmem [resolvable:$true] %s250
      %253 = dma.vmem_to_hbm [thread:$0]  %s251, 128, %s2, [#allocation4]
    $region21: #{tpu_custom_call.1} parent=1 // pred_fallthru
      _
    // Predicated region
    $region22: #{tpu_custom_call.1} parent=1 // pred_check
      _
    $region23: #{tpu_custom_call.1} parent=1 // pred_check_branch
      %255 = sbr.rel (0) target = $region25
    $region24: #{tpu_custom_call.1} parent=1 // pred_region
      %256 = dma.done [#allocation4], 128
    $region25: #{tpu_custom_call.1} parent=1 // pred_fallthru
      _
    %257 = vsyncpa [#allocation3], 1
    %258 = vsyncpa [#allocation6], 1
    %259 = vsyncpa [#allocation4], 1

</llo_original>
